<compile_context>
chip_gen: v6e
topology: v6e:2x2x1
jax: 0.10.0
libtpu: 0.0.40
codegen_flags: <defaults>
</compile_context>

<pallas_src>
import functools

import jax
import jax.numpy as jnp
from jax.experimental import pallas as pl
from jax.experimental.pallas import tpu as pltpu

LANE = 128     # vreg lane width -> lane-dense hidden / output slabs
SUBLANE = 8


def _round_up(n, m):
    return (n + m - 1) // m * m


def _pad_to(a, shape):
    return jnp.pad(a, [(0, t - s) for s, t in zip(a.shape, shape)])


def qnetwork_kernel(x_ref, w1_ref, b1_ref, w2_ref, b2_ref, w3_ref, b3_ref, o_ref):
    """One batch tile of the fused MLP. Parameters are VMEM-resident across the grid."""
    cdt = w1_ref.dtype  # MXU operand dtype (f32 or bf16); accumulation is always f32
    # fc1 + ReLU  (bias add / ReLU kept in f32 — cheap even on v5e's no-bf16 VPU)
    h1 = jnp.dot(x_ref[...], w1_ref[...], preferred_element_type=jnp.float32)
    h1 = jnp.maximum(h1 + b1_ref[...], 0.0)
    # fc2 + ReLU
    h2 = jnp.dot(h1.astype(cdt), w2_ref[...], preferred_element_type=jnp.float32)
    h2 = jnp.maximum(h2 + b2_ref[...], 0.0)
    # fc3 (no activation)
    out = jnp.dot(h2.astype(cdt), w3_ref[...], preferred_element_type=jnp.float32)
    o_ref[...] = (out + b3_ref[...]).astype(o_ref.dtype)


@functools.partial(jax.jit, static_argnames=("batch_tile", "compute_dtype"))
def qnetwork_forward(x, params, *, batch_tile=512, compute_dtype=jnp.float32):
    w1, b1, w2, b2, w3, b3 = params          # pre-transposed: (in, out)
    batch, in_f = x.shape
    hid = w1.shape[1]
    out_f = w3.shape[1]

    # --- lane-dense padding: hidden / output widths up to multiples of 128.
    #     Zero-padded weight columns/rows contribute nothing; ReLU(0)=0.
    hid_p = _round_up(hid, LANE)
    out_p = _round_up(out_f, LANE)

    cdt = compute_dtype
    w1p = _pad_to(w1, (in_f, hid_p)).astype(cdt)
    b1p = _pad_to(b1, (1, hid_p))                          # biases stay f32
    w2p = _pad_to(w2, (hid_p, hid_p)).astype(cdt)
    b2p = _pad_to(b2, (1, hid_p))
    w3p = _pad_to(w3, (hid_p, out_p)).astype(cdt)
    b3p = _pad_to(b3, (1, out_p))

    # --- batch tiling: grid over batch, activations streamed, params resident.
    min_sub = SUBLANE if jnp.dtype(cdt).itemsize >= 4 else 2 * SUBLANE
    tb = max(min_sub, min(batch_tile, _round_up(batch, min_sub)))
    tb = _round_up(tb, min_sub)
    batch_p = _round_up(batch, tb)
    x_p = _pad_to(x, (batch_p, in_f)).astype(cdt)
    n_blocks = batch_p // tb

    def const2d(a):
        return pl.BlockSpec(a.shape, lambda i: (0, 0))

    flops = 2 * batch_p * (in_f * hid_p + hid_p * hid_p + hid_p * out_p)
    bytes_accessed = (
        x_p.size * x_p.dtype.itemsize
        + sum(a.size * a.dtype.itemsize for a in (w1p, b1p, w2p, b2p, w3p, b3p))
        + batch_p * out_p * 4
    )

    out_padded = pl.pallas_call(
        qnetwork_kernel,
        out_shape=jax.ShapeDtypeStruct((batch_p, out_p), jnp.float32),
        grid_spec=pltpu.PrefetchScalarGridSpec(
            num_scalar_prefetch=0,
            grid=(n_blocks,),
            in_specs=[
                pl.BlockSpec((tb, in_f), lambda i: (i, 0)),   # streamed activations
                const2d(w1p), const2d(b1p),                   # resident parameters
                const2d(w2p), const2d(b2p),
                const2d(w3p), const2d(b3p),
            ],
            out_specs=pl.BlockSpec((tb, out_p), lambda i: (i, 0)),
        ),
        compiler_params=pltpu.CompilerParams(
            dimension_semantics=("parallel",)),               # megacore split (v7x)
        cost_estimate=pl.CostEstimate(
            flops=flops, transcendentals=0, bytes_accessed=bytes_accessed),
    )(x_p, w1p, b1p, w2p, b2p, w3p, b3p)

    return out_padded[:batch, :out_f]


def init_params(key, input_size, output_size, hidden=64):
    """Deterministic init mimicking nn.Linear's uniform(-1/sqrt(fan_in), ...)."""
    ks = jax.random.split(key, 6)

    def linear(kw, kb, fan_in, fan_out):
        bound = 1.0 / jnp.sqrt(fan_in)
        # stored transposed: (in, out) so the kernel does x @ W + b
        w = jax.random.uniform(kw, (fan_in, fan_out), jnp.float32, -bound, bound)
        b = jax.random.uniform(kb, (1, fan_out), jnp.float32, -bound, bound)
        return w, b

    w1, b1 = linear(ks[0], ks[1], input_size, hidden)
    w2, b2 = linear(ks[2], ks[3], hidden, hidden)
    w3, b3 = linear(ks[4], ks[5], hidden, output_size)
    return (w1, b1, w2, b2, w3, b3)


if __name__ == "__main__":
    key = jax.random.PRNGKey(0)
    k_x, k_p, k_x2 = jax.random.split(key, 3)

    input_size, output_size, hidden = 16, 4, 64
    params = init_params(k_p, input_size, output_size, hidden)
    w1, b1, w2, b2, w3, b3 = params

    def ref_forward(xx):
        h = jnp.maximum(xx @ w1 + b1, 0.0)
        h = jnp.maximum(h @ w2 + b2, 0.0)
        return h @ w3 + b3

    # 1) small batch (single grid step), f32 compute -> tight tolerance
    x_small = jax.random.normal(k_x, (8, input_size), jnp.float32)
    y_small = qnetwork_forward(x_small, params)
    jax.block_until_ready(y_small)
    assert y_small.shape == (8, output_size)
    assert jnp.allclose(y_small, ref_forward(x_small), atol=2e-5, rtol=2e-5)

    # 2) larger, non-multiple batch (multi-step grid + batch padding), f32
    x_big = jax.random.normal(k_x2, (200, input_size), jnp.float32)
    y_big = qnetwork_forward(x_big, params, batch_tile=128)
    jax.block_until_ready(y_big)
    assert y_big.shape == (200, output_size)
    assert jnp.allclose(y_big, ref_forward(x_big), atol=2e-5, rtol=2e-5)

    # 3) bf16 MXU operands (v6e/v7x fast path), f32 accumulation -> loose tolerance
    y_bf16 = qnetwork_forward(x_big, params, batch_tile=128,
                              compute_dtype=jnp.bfloat16)
    jax.block_until_ready(y_bf16)
    assert y_bf16.shape == (200, output_size)
    assert jnp.allclose(y_bf16, ref_forward(x_big), atol=1e-1, rtol=1e-1)

    print("KERNEL_OK")
</pallas_src>

<mosaic_0001>
module attributes {stable_mosaic.version = 11 : i64} {
  func.func @qnetwork_kernel(%arg0: i32, %arg1: memref<8x16xf32, #tpu.memory_space<vmem>>, %arg2: memref<16x128xf32, #tpu.memory_space<vmem>>, %arg3: memref<1x128xf32, #tpu.memory_space<vmem>>, %arg4: memref<128x128xf32, #tpu.memory_space<vmem>>, %arg5: memref<1x128xf32, #tpu.memory_space<vmem>>, %arg6: memref<128x128xf32, #tpu.memory_space<vmem>>, %arg7: memref<1x128xf32, #tpu.memory_space<vmem>>, %arg8: memref<8x128xf32, #tpu.memory_space<vmem>>) attributes {dimension_semantics = [#tpu.dimension_semantics<parallel>], iteration_bounds = array<i64: 1>, scalar_prefetch = 0 : i64, scratch_operands = 0 : i64, tpu.core_type = #tpu.core_type<tc>, window_params = [{transform_indices = @transform_0, window_bounds = array<i64: 8, 16>}, {pipeline_mode = #tpu.pipeline_mode<synchronous>, transform_indices = @transform_1, window_bounds = array<i64: 16, 128>}, {pipeline_mode = #tpu.pipeline_mode<synchronous>, transform_indices = @transform_2, window_bounds = array<i64: 1, 128>}, {pipeline_mode = #tpu.pipeline_mode<synchronous>, transform_indices = @transform_3, window_bounds = array<i64: 128, 128>}, {pipeline_mode = #tpu.pipeline_mode<synchronous>, transform_indices = @transform_4, window_bounds = array<i64: 1, 128>}, {pipeline_mode = #tpu.pipeline_mode<synchronous>, transform_indices = @transform_5, window_bounds = array<i64: 128, 128>}, {pipeline_mode = #tpu.pipeline_mode<synchronous>, transform_indices = @transform_6, window_bounds = array<i64: 1, 128>}, {transform_indices = @transform_7, window_bounds = array<i64: 8, 128>}]} {
    %c0 = arith.constant 0 : index
    %c0_0 = arith.constant 0 : index
    %0 = vector.load %arg1[%c0, %c0_0] : memref<8x16xf32, #tpu.memory_space<vmem>>, vector<8x16xf32>
    %c0_1 = arith.constant 0 : index
    %c0_2 = arith.constant 0 : index
    %1 = vector.load %arg2[%c0_1, %c0_2] : memref<16x128xf32, #tpu.memory_space<vmem>>, vector<16x128xf32>
    %cst = arith.constant dense<0.000000e+00> : vector<8x128xf32>
    %2 = tpu.matmul %0, %1, %cst {dimension_numbers = #tpu.dot_dimension_numbers<[1], [0], [0], [1], [0, 0, 1, 1], [], []>} : vector<8x16xf32>, vector<16x128xf32>, vector<8x128xf32> -> vector<8x128xf32>
    %c0_3 = arith.constant 0 : index
    %c0_4 = arith.constant 0 : index
    %3 = vector.load %arg3[%c0_3, %c0_4] : memref<1x128xf32, #tpu.memory_space<vmem>>, vector<1x128xf32>
    %4 = vector.broadcast %3 : vector<1x128xf32> to vector<8x128xf32>
    %5 = arith.addf %2, %4 : vector<8x128xf32>
    %cst_5 = arith.constant 0.000000e+00 : f32
    %6 = vector.broadcast %cst_5 : f32 to vector<8x128xf32>
    %7 = arith.maximumf %5, %6 : vector<8x128xf32>
    %c0_6 = arith.constant 0 : index
    %c0_7 = arith.constant 0 : index
    %8 = vector.load %arg4[%c0_6, %c0_7] : memref<128x128xf32, #tpu.memory_space<vmem>>, vector<128x128xf32>
    %cst_8 = arith.constant dense<0.000000e+00> : vector<8x128xf32>
    %9 = tpu.matmul %7, %8, %cst_8 {dimension_numbers = #tpu.dot_dimension_numbers<[1], [0], [0], [1], [0, 0, 1, 1], [], []>} : vector<8x128xf32>, vector<128x128xf32>, vector<8x128xf32> -> vector<8x128xf32>
    %c0_9 = arith.constant 0 : index
    %c0_10 = arith.constant 0 : index
    %10 = vector.load %arg5[%c0_9, %c0_10] : memref<1x128xf32, #tpu.memory_space<vmem>>, vector<1x128xf32>
    %11 = vector.broadcast %10 : vector<1x128xf32> to vector<8x128xf32>
    %12 = arith.addf %9, %11 : vector<8x128xf32>
    %cst_11 = arith.constant 0.000000e+00 : f32
    %13 = vector.broadcast %cst_11 : f32 to vector<8x128xf32>
    %14 = arith.maximumf %12, %13 : vector<8x128xf32>
    %c0_12 = arith.constant 0 : index
    %c0_13 = arith.constant 0 : index
    %15 = vector.load %arg6[%c0_12, %c0_13] : memref<128x128xf32, #tpu.memory_space<vmem>>, vector<128x128xf32>
    %cst_14 = arith.constant dense<0.000000e+00> : vector<8x128xf32>
    %16 = tpu.matmul %14, %15, %cst_14 {dimension_numbers = #tpu.dot_dimension_numbers<[1], [0], [0], [1], [0, 0, 1, 1], [], []>} : vector<8x128xf32>, vector<128x128xf32>, vector<8x128xf32> -> vector<8x128xf32>
    %c0_15 = arith.constant 0 : index
    %c0_16 = arith.constant 0 : index
    %17 = vector.load %arg7[%c0_15, %c0_16] : memref<1x128xf32, #tpu.memory_space<vmem>>, vector<1x128xf32>
    %18 = vector.broadcast %17 : vector<1x128xf32> to vector<8x128xf32>
    %19 = arith.addf %16, %18 : vector<8x128xf32>
    %c0_17 = arith.constant 0 : index
    %c0_18 = arith.constant 0 : index
    %20 = vector.load %arg8[%c0_17, %c0_18] : memref<8x128xf32, #tpu.memory_space<vmem>>, vector<8x128xf32>
    tpu.vector_store %arg8[%c0_17, %c0_18], %19 {strides = array<i32>} : memref<8x128xf32, #tpu.memory_space<vmem>>, vector<8x128xf32>,
    return
  }
  func.func @transform_0(%arg0: i32) -> (i32, i32) {
    %c0_i32 = arith.constant 0 : i32
    %c0_i32_0 = arith.constant 0 : i32
    return %arg0, %c0_i32 : i32, i32
  }
  func.func @transform_1(%arg0: i32) -> (i32, i32) {
    %c0_i32 = arith.constant 0 : i32
    %c0_i32_0 = arith.constant 0 : i32
    %c0_i32_1 = arith.constant 0 : i32
    return %c0_i32, %c0_i32_0 : i32, i32
  }
  func.func @transform_2(%arg0: i32) -> (i32, i32) {
    %c0_i32 = arith.constant 0 : i32
    %c0_i32_0 = arith.constant 0 : i32
    %c0_i32_1 = arith.constant 0 : i32
    return %c0_i32, %c0_i32_0 : i32, i32
  }
  func.func @transform_3(%arg0: i32) -> (i32, i32) {
    %c0_i32 = arith.constant 0 : i32
    %c0_i32_0 = arith.constant 0 : i32
    %c0_i32_1 = arith.constant 0 : i32
    return %c0_i32, %c0_i32_0 : i32, i32
  }
  func.func @transform_4(%arg0: i32) -> (i32, i32) {
    %c0_i32 = arith.constant 0 : i32
    %c0_i32_0 = arith.constant 0 : i32
    %c0_i32_1 = arith.constant 0 : i32
    return %c0_i32, %c0_i32_0 : i32, i32
  }
  func.func @transform_5(%arg0: i32) -> (i32, i32) {
    %c0_i32 = arith.constant 0 : i32
    %c0_i32_0 = arith.constant 0 : i32
    %c0_i32_1 = arith.constant 0 : i32
    return %c0_i32, %c0_i32_0 : i32, i32
  }
  func.func @transform_6(%arg0: i32) -> (i32, i32) {
    %c0_i32 = arith.constant 0 : i32
    %c0_i32_0 = arith.constant 0 : i32
    %c0_i32_1 = arith.constant 0 : i32
    return %c0_i32, %c0_i32_0 : i32, i32
  }
  func.func @transform_7(%arg0: i32) -> (i32, i32) {
    %c0_i32 = arith.constant 0 : i32
    %c0_i32_0 = arith.constant 0 : i32
    return %arg0, %c0_i32 : i32, i32
  }
}

</mosaic_0001>

<llo_original>
// kernel: qnetwork_forward.1
$region0: #{qnetwork_forward.1}
  #allocation0 [shape = 'u32[]', space=smem, size = 0x4, offset = 0x4, fixed_abs, tag = 'smem constant byte address 0x4 - core index']
  #allocation1 [shape = 'u32[144,128]{1,0:T(1,128)}', space=vmem, size = 0x12000, scoped, tag = 'internal scratch']
  %s0 = inlined_call_operand.vmem [shape: f32[8,16], index: 0, kind: input, shape index: {}]
  %s1 = inlined_call_operand.vmem [shape: f32[16,128], index: 1, kind: input, shape index: {}]
  %s2 = inlined_call_operand.vmem [shape: f32[1,128], index: 2, kind: input, shape index: {}]
  %s3 = inlined_call_operand.vmem [shape: f32[128,128], index: 3, kind: input, shape index: {}]
  %s4 = inlined_call_operand.vmem [shape: f32[1,128], index: 4, kind: input, shape index: {}]
  %s5 = inlined_call_operand.vmem [shape: f32[128,128], index: 5, kind: input, shape index: {}]
  %s6 = inlined_call_operand.vmem [shape: f32[1,128], index: 6, kind: input, shape index: {}]
  %s7 = inlined_call_operand.vmem [shape: f32[8,128], index: 7, kind: output, shape index: {}]
  %s8 = sld [smem:[#allocation0]]
  $region38: #{qnetwork_forward.1} parent=0
    _
  %s10 = ssub.s32 1, %s8
  %s11 = scalar_select 0, %s10, %s8
  // Predicated region
  $region2: #{qnetwork_forward.1} parent=0 // pred_check
    _
  $region3: #{qnetwork_forward.1} parent=0 // pred_check_branch
    %13 = sbr.rel (0) target = $region5
  $region4: #{qnetwork_forward.1} parent=0 // pred_region
    _
  $region5: #{qnetwork_forward.1} parent=0 // pred_fallthru
    _
  // Predicated region
  $region6: #{qnetwork_forward.1} parent=0 // pred_check
    _
  $region7: #{qnetwork_forward.1} parent=0 // pred_check_branch
    %15 = sbr.rel (0) target = $region9
  $region8: #{qnetwork_forward.1} parent=0 // pred_region
    _
  $region9: #{qnetwork_forward.1} parent=0 // pred_fallthru
    _
  // Predicated region
  $region10: #{qnetwork_forward.1} parent=0 // pred_check
    _
  $region11: #{qnetwork_forward.1} parent=0 // pred_check_branch
    %17 = sbr.rel (0) target = $region13
  $region12: #{qnetwork_forward.1} parent=0 // pred_region
    _
  $region13: #{qnetwork_forward.1} parent=0 // pred_fallthru
    _
  // Predicated region
  $region14: #{qnetwork_forward.1} parent=0 // pred_check
    _
  $region15: #{qnetwork_forward.1} parent=0 // pred_check_branch
    %19 = sbr.rel (0) target = $region17
  $region16: #{qnetwork_forward.1} parent=0 // pred_region
    _
  $region17: #{qnetwork_forward.1} parent=0 // pred_fallthru
    _
  // Predicated region
  $region18: #{qnetwork_forward.1} parent=0 // pred_check
    _
  $region19: #{qnetwork_forward.1} parent=0 // pred_check_branch
    %21 = sbr.rel (0) target = $region21
  $region20: #{qnetwork_forward.1} parent=0 // pred_region
    _
  $region21: #{qnetwork_forward.1} parent=0 // pred_fallthru
    _
  // Predicated region
  $region22: #{qnetwork_forward.1} parent=0 // pred_check
    _
  $region23: #{qnetwork_forward.1} parent=0 // pred_check_branch
    %23 = sbr.rel (0) target = $region25
  $region24: #{qnetwork_forward.1} parent=0 // pred_region
    _
  $region25: #{qnetwork_forward.1} parent=0 // pred_fallthru
    _
  // Predicated region
  $region26: #{qnetwork_forward.1} parent=0 // pred_check
    _
  $region27: #{qnetwork_forward.1} parent=0 // pred_check_branch
    %25 = sbr.rel (0) target = $region29
  $region28: #{qnetwork_forward.1} parent=0 // pred_region
    _
  $region29: #{qnetwork_forward.1} parent=0 // pred_fallthru
    _
  %v26 = vld [vmem:[%s0] sm:$0xff]
  %v27 = vld [vmem:[%s1] sm:$0xff]
  %v28 = vld [vmem:[%s1 + $0x8] sm:$0xff]
  %v29 = vld [vmem:[%s2] sm:$0x1]
  %v31 = vlaneseq
  %v32 = vshrl.u32 %v31, 7
  %v33 = vsub.s32 0, %v32
  %v34 = vrot.slane %v29, %v33
  %vm36 = vcmask 130048
  %v38 = vsel %vm36, %v26, 0
  %40 = vmatprep.subr.mxu0 0.0
  %41 = vmatpush1.msra.mxu0 0.0
  %42 = vmatprep.subr.mxu0 0.0
  %43 = vmatpush1.msra.mxu0 0.0
  %44 = vmatprep.subr.mxu0 0.0
  %45 = vmatpush1.msra.mxu0 0.0
  %46 = vmatprep.subr.mxu0 0.0
  %47 = vmatpush1.msra.mxu0 0.0
  %48 = vmatprep.subr.mxu0 0.0
  %49 = vmatpush1.msra.mxu0 0.0
  %50 = vmatprep.subr.mxu0 0.0
  %51 = vmatpush1.msra.mxu0 0.0
  %52 = vmatprep.subr.mxu0 0.0
  %53 = vmatpush1.msra.mxu0 0.0
  %54 = vmatprep.subr.mxu0 0.0
  %55 = vmatpush1.msra.mxu0 0.0
  %56 = vmatprep.subr.mxu0 0.0
  %57 = vmatpush1.msra.mxu0 0.0
  %58 = vmatprep.subr.mxu0 0.0
  %59 = vmatpush1.msra.mxu0 0.0
  %60 = vmatprep.subr.mxu0 0.0
  %61 = vmatpush1.msra.mxu0 0.0
  %62 = vmatprep.subr.mxu0 0.0
  %63 = vmatpush1.msra.mxu0 0.0
  %64 = vmatprep.subr.mxu0 0.0
  %65 = vmatpush1.msra.mxu0 0.0
  %66 = vmatprep.subr.mxu0 0.0
  %67 = vmatpush1.msra.mxu0 0.0
  %68 = vmatprep.subr.mxu0 0.0
  %69 = vmatpush1.msra.mxu0 %v28
  %70 = vmatprep.subr.mxu0 0.0
  %71 = vmatpush1.msra.mxu0 %v27
  %72 = vmatprep.subr.mxu0 0.0
  %73 = vmatpush2.msra.mxu0 0.0
  %74 = vmatprep.subr.mxu0 0.0
  %75 = vmatpush2.msra.mxu0 0.0
  %76 = vmatprep.subr.mxu0 0.0
  %77 = vmatpush2.msra.mxu0 0.0
  %78 = vmatprep.subr.mxu0 0.0
  %79 = vmatpush2.msra.mxu0 0.0
  %80 = vmatprep.subr.mxu0 0.0
  %81 = vmatpush2.msra.mxu0 0.0
  %82 = vmatprep.subr.mxu0 0.0
  %83 = vmatpush2.msra.mxu0 0.0
  %84 = vmatprep.subr.mxu0 0.0
  %85 = vmatpush2.msra.mxu0 0.0
  %86 = vmatprep.subr.mxu0 0.0
  %87 = vmatpush2.msra.mxu0 0.0
  %88 = vmatprep.subr.mxu0 0.0
  %89 = vmatpush2.msra.mxu0 0.0
  %90 = vmatprep.subr.mxu0 0.0
  %91 = vmatpush2.msra.mxu0 0.0
  %92 = vmatprep.subr.mxu0 0.0
  %93 = vmatpush2.msra.mxu0 0.0
  %94 = vmatprep.subr.mxu0 0.0
  %95 = vmatpush2.msra.mxu0 0.0
  %96 = vmatprep.subr.mxu0 0.0
  %97 = vmatpush2.msra.mxu0 0.0
  %98 = vmatprep.subr.mxu0 0.0
  %99 = vmatpush2.msra.mxu0 0.0
  %100 = vmatprep.subr.mxu0 0.0
  %101 = vmatpush2.msra.mxu0 0.0
  %102 = vmatprep.subr.mxu0 0.0
  %103 = vmatpush2.msra.mxu0 0.0
  %104 = vmatprep.mubr.f32.mxu0 0.0
  %105 = vmatmul.mubr.f32.gmra.mxu0 %v38
  %v106 = vpop.f32.mrf.mxu0
  %v107 = vadd.f32 %v34, %v106
  %v108 = vpop.f32.mrf.mxu0
  %109 = vdwg.mxu0
  %v110 = vmax.f32 %v107, 0.0
  %v111 = vld [vmem:[%s3] sm:$0xff]
  %v112 = vld [vmem:[%s3 + $0x8] sm:$0xff]
  %v113 = vld [vmem:[%s3 + $0x10] sm:$0xff]
  %v114 = vld [vmem:[%s3 + $0x18] sm:$0xff]
  %v115 = vld [vmem:[%s3 + $0x20] sm:$0xff]
  %v116 = vld [vmem:[%s3 + $0x28] sm:$0xff]
  %v117 = vld [vmem:[%s3 + $0x30] sm:$0xff]
  %v118 = vld [vmem:[%s3 + $0x38] sm:$0xff]
  %v119 = vld [vmem:[%s3 + $0x40] sm:$0xff]
  %v120 = vld [vmem:[%s3 + $0x48] sm:$0xff]
  %v121 = vld [vmem:[%s3 + $0x50] sm:$0xff]
  %v122 = vld [vmem:[%s3 + $0x58] sm:$0xff]
  %v123 = vld [vmem:[%s3 + $0x60] sm:$0xff]
  %v124 = vld [vmem:[%s3 + $0x68] sm:$0xff]
  %v125 = vld [vmem:[%s3 + $0x70] sm:$0xff]
  %v126 = vld [vmem:[%s3 + $0x78] sm:$0xff]
  %v127 = vld [vmem:[%s4] sm:$0x1]
  %v129 = vlaneseq
  %v130 = vshrl.u32 %v129, 7
  %v131 = vsub.s32 0, %v130
  %v132 = vrot.slane %v127, %v131
  %134 = vmatprep.subr.mxu0 0.0
  %135 = vmatpush1.msra.mxu0 %v126
  %136 = vmatprep.subr.mxu0 0.0
  %137 = vmatpush1.msra.mxu0 %v125
  %138 = vmatprep.subr.mxu0 0.0
  %139 = vmatpush1.msra.mxu0 %v124
  %140 = vmatprep.subr.mxu0 0.0
  %141 = vmatpush1.msra.mxu0 %v123
  %142 = vmatprep.subr.mxu0 0.0
  %143 = vmatpush1.msra.mxu0 %v122
  %144 = vmatprep.subr.mxu0 0.0
  %145 = vmatpush1.msra.mxu0 %v121
  %146 = vmatprep.subr.mxu0 0.0
  %147 = vmatpush1.msra.mxu0 %v120
  %148 = vmatprep.subr.mxu0 0.0
  %149 = vmatpush1.msra.mxu0 %v119
  %150 = vmatprep.subr.mxu0 0.0
  %151 = vmatpush1.msra.mxu0 %v118
  %152 = vmatprep.subr.mxu0 0.0
  %153 = vmatpush1.msra.mxu0 %v117
  %154 = vmatprep.subr.mxu0 0.0
  %155 = vmatpush1.msra.mxu0 %v116
  %156 = vmatprep.subr.mxu0 0.0
  %157 = vmatpush1.msra.mxu0 %v115
  %158 = vmatprep.subr.mxu0 0.0
  %159 = vmatpush1.msra.mxu0 %v114
  %160 = vmatprep.subr.mxu0 0.0
  %161 = vmatpush1.msra.mxu0 %v113
  %162 = vmatprep.subr.mxu0 0.0
  %163 = vmatpush1.msra.mxu0 %v112
  %164 = vmatprep.subr.mxu0 0.0
  %165 = vmatpush1.msra.mxu0 %v111
  %166 = vmatprep.subr.mxu0 0.0
  %167 = vmatpush2.msra.mxu0 0.0
  %168 = vmatprep.subr.mxu0 0.0
  %169 = vmatpush2.msra.mxu0 0.0
  %170 = vmatprep.subr.mxu0 0.0
  %171 = vmatpush2.msra.mxu0 0.0
  %172 = vmatprep.subr.mxu0 0.0
  %173 = vmatpush2.msra.mxu0 0.0
  %174 = vmatprep.subr.mxu0 0.0
  %175 = vmatpush2.msra.mxu0 0.0
  %176 = vmatprep.subr.mxu0 0.0
  %177 = vmatpush2.msra.mxu0 0.0
  %178 = vmatprep.subr.mxu0 0.0
  %179 = vmatpush2.msra.mxu0 0.0
  %180 = vmatprep.subr.mxu0 0.0
  %181 = vmatpush2.msra.mxu0 0.0
  %182 = vmatprep.subr.mxu0 0.0
  %183 = vmatpush2.msra.mxu0 0.0
  %184 = vmatprep.subr.mxu0 0.0
  %185 = vmatpush2.msra.mxu0 0.0
  %186 = vmatprep.subr.mxu0 0.0
  %187 = vmatpush2.msra.mxu0 0.0
  %188 = vmatprep.subr.mxu0 0.0
  %189 = vmatpush2.msra.mxu0 0.0
  %190 = vmatprep.subr.mxu0 0.0
  %191 = vmatpush2.msra.mxu0 0.0
  %192 = vmatprep.subr.mxu0 0.0
  %193 = vmatpush2.msra.mxu0 0.0
  %194 = vmatprep.subr.mxu0 0.0
  %195 = vmatpush2.msra.mxu0 0.0
  %196 = vmatprep.subr.mxu0 0.0
  %197 = vmatpush2.msra.mxu0 0.0
  %198 = vmatprep.mubr.f32.mxu0 0.0
  %199 = vmatmul.mubr.f32.gmra.mxu0 %v110
  %v200 = vpop.f32.mrf.mxu0
  %v201 = vadd.f32 %v132, %v200
  %v202 = vpop.f32.mrf.mxu0
  %203 = vdwg.mxu0
  %v204 = vmax.f32 %v201, 0.0
  %v205 = vld [vmem:[%s5] sm:$0xff]
  %v206 = vld [vmem:[%s5 + $0x8] sm:$0xff]
  %v207 = vld [vmem:[%s5 + $0x10] sm:$0xff]
  %v208 = vld [vmem:[%s5 + $0x18] sm:$0xff]
  %v209 = vld [vmem:[%s5 + $0x20] sm:$0xff]
  %v210 = vld [vmem:[%s5 + $0x28] sm:$0xff]
  %v211 = vld [vmem:[%s5 + $0x30] sm:$0xff]
  %v212 = vld [vmem:[%s5 + $0x38] sm:$0xff]
  %v213 = vld [vmem:[%s5 + $0x40] sm:$0xff]
  %v214 = vld [vmem:[%s5 + $0x48] sm:$0xff]
  %v215 = vld [vmem:[%s5 + $0x50] sm:$0xff]
  %v216 = vld [vmem:[%s5 + $0x58] sm:$0xff]
  %v217 = vld [vmem:[%s5 + $0x60] sm:$0xff]
  %v218 = vld [vmem:[%s5 + $0x68] sm:$0xff]
  %v219 = vld [vmem:[%s5 + $0x70] sm:$0xff]
  %v220 = vld [vmem:[%s5 + $0x78] sm:$0xff]
  %v221 = vld [vmem:[%s6] sm:$0x1]
  %v223 = vlaneseq
  %v224 = vshrl.u32 %v223, 7
  %v225 = vsub.s32 0, %v224
  %v226 = vrot.slane %v221, %v225
  %228 = vmatprep.subr.mxu0 0.0
  %229 = vmatpush1.msra.mxu0 %v220
  %230 = vmatprep.subr.mxu0 0.0
  %231 = vmatpush1.msra.mxu0 %v219
  %232 = vmatprep.subr.mxu0 0.0
  %233 = vmatpush1.msra.mxu0 %v218
  %234 = vmatprep.subr.mxu0 0.0
  %235 = vmatpush1.msra.mxu0 %v217
  %236 = vmatprep.subr.mxu0 0.0
  %237 = vmatpush1.msra.mxu0 %v216
  %238 = vmatprep.subr.mxu0 0.0
  %239 = vmatpush1.msra.mxu0 %v215
  %240 = vmatprep.subr.mxu0 0.0
  %241 = vmatpush1.msra.mxu0 %v214
  %242 = vmatprep.subr.mxu0 0.0
  %243 = vmatpush1.msra.mxu0 %v213
  %244 = vmatprep.subr.mxu0 0.0
  %245 = vmatpush1.msra.mxu0 %v212
  %246 = vmatprep.subr.mxu0 0.0
  %247 = vmatpush1.msra.mxu0 %v211
  %248 = vmatprep.subr.mxu0 0.0
  %249 = vmatpush1.msra.mxu0 %v210
  %250 = vmatprep.subr.mxu0 0.0
  %251 = vmatpush1.msra.mxu0 %v209
  %252 = vmatprep.subr.mxu0 0.0
  %253 = vmatpush1.msra.mxu0 %v208
  %254 = vmatprep.subr.mxu0 0.0
  %255 = vmatpush1.msra.mxu0 %v207
  %256 = vmatprep.subr.mxu0 0.0
  %257 = vmatpush1.msra.mxu0 %v206
  %258 = vmatprep.subr.mxu0 0.0
  %259 = vmatpush1.msra.mxu0 %v205
  %260 = vmatprep.subr.mxu0 0.0
  %261 = vmatpush2.msra.mxu0 0.0
  %262 = vmatprep.subr.mxu0 0.0
  %263 = vmatpush2.msra.mxu0 0.0
  %264 = vmatprep.subr.mxu0 0.0
  %265 = vmatpush2.msra.mxu0 0.0
  %266 = vmatprep.subr.mxu0 0.0
  %267 = vmatpush2.msra.mxu0 0.0
  %268 = vmatprep.subr.mxu0 0.0
  %269 = vmatpush2.msra.mxu0 0.0
  %270 = vmatprep.subr.mxu0 0.0
  %271 = vmatpush2.msra.mxu0 0.0
  %272 = vmatprep.subr.mxu0 0.0
  %273 = vmatpush2.msra.mxu0 0.0
  %274 = vmatprep.subr.mxu0 0.0
  %275 = vmatpush2.msra.mxu0 0.0
  %276 = vmatprep.subr.mxu0 0.0
  %277 = vmatpush2.msra.mxu0 0.0
  %278 = vmatprep.subr.mxu0 0.0
  %279 = vmatpush2.msra.mxu0 0.0
  %280 = vmatprep.subr.mxu0 0.0
  %281 = vmatpush2.msra.mxu0 0.0
  %282 = vmatprep.subr.mxu0 0.0
  %283 = vmatpush2.msra.mxu0 0.0
  %284 = vmatprep.subr.mxu0 0.0
  %285 = vmatpush2.msra.mxu0 0.0
  %286 = vmatprep.subr.mxu0 0.0
  %287 = vmatpush2.msra.mxu0 0.0
  %288 = vmatprep.subr.mxu0 0.0
  %289 = vmatpush2.msra.mxu0 0.0
  %290 = vmatprep.subr.mxu0 0.0
  %291 = vmatpush2.msra.mxu0 0.0
  %292 = vmatprep.mubr.f32.mxu0 0.0
  %293 = vmatmul.mubr.f32.gmra.mxu0 %v204
  %v294 = vpop.f32.mrf.mxu0
  %v295 = vadd.f32 %v226, %v294
  %v296 = vpop.f32.mrf.mxu0
  %297 = vdwg.mxu0
  %298 = vst [vmem:[%s7] sm:$0xff] %v295
  // Predicated region
  $region30: #{qnetwork_forward.1} parent=0 // pred_check
    _
  $region31: #{qnetwork_forward.1} parent=0 // pred_check_branch
    %300 = sbr.rel (0) target = $region33
  $region32: #{qnetwork_forward.1} parent=0 // pred_region
    _
  $region33: #{qnetwork_forward.1} parent=0 // pred_fallthru
    _
  // Predicated region
  $region34: #{qnetwork_forward.1} parent=0 // pred_check
    _
  $region35: #{qnetwork_forward.1} parent=0 // pred_check_branch
    %302 = sbr.rel (0) target = $region37
  $region36: #{qnetwork_forward.1} parent=0 // pred_region
    _
  $region37: #{qnetwork_forward.1} parent=0 // pred_fallthru
    _

</llo_original>
